<compile_context>
chip_gen: v5e
topology: v5e:2x2
jax: 0.10.0
libtpu: 0.0.40
codegen_flags: <defaults>
</compile_context>

<pallas_src>
import functools

import jax
import jax.numpy as jnp
from jax.experimental import pallas as pl
from jax.experimental.pallas import tpu as pltpu


def _residual_block_kernel(x_ref, w1_ref, b1_ref, w2_ref, b2_ref, o_ref,
                           ext_ref, col_ref, *, seq_len, seg, kernel_size,
                           negative_slope):
    """Residual block on one lane-dense slab of packed, pre-padded sequences.

    x_ref  : (C, cols)        packed activations, cols = batch_tile * seg
    w*_ref : (C, K*C)         conv weights, taps folded into the contraction dim
    b*_ref : (C, 1)           conv biases
    o_ref  : (C, cols)        output slab (same packing as the input)
    ext_ref: (C, cols + 2p)   halo-extended scratch (edges stay zero)
    col_ref: (K*C, cols)      im2col scratch (reused for both convs)
    """
    C, cols = x_ref.shape
    K = kernel_size
    pad = K // 2

    # Zero the halo-extended scratch once; scratch persists across grid steps
    # and only its 2*pad edge columns are never overwritten below.  (The
    # validity mask makes the result independent of those columns anyway, so
    # this is belt-and-suspenders, not a correctness requirement.)
    @pl.when(pl.program_id(0) == 0)
    def _():
        ext_ref[...] = jnp.zeros_like(ext_ref)

    # Columns holding real samples: each length-`seg` segment of the slab is
    # [pad zeros | seq_len samples | pad zeros].
    pos = jax.lax.broadcasted_iota(jnp.int32, (1, cols), 1) % seg
    valid = jnp.logical_and(pos >= pad, pos < pad + seq_len)

    x = x_ref[...]                                        # (C, cols), in dtype

    def conv(inp, w_ref, b_ref):
        # im2col: stack the K shifted views -> (K*C, cols), one MXU matmul.
        ext_ref[:, pad:pad + cols] = inp
        for k in range(K):                                # static, unrolled
            col_ref[k * C:(k + 1) * C, :] = ext_ref[:, k:k + cols]
        acc = jnp.dot(w_ref[...], col_ref[...],
                      preferred_element_type=jnp.float32)
        return acc + b_ref[...].astype(jnp.float32)       # (C, cols), f32

    # conv1 -> LeakyReLU -> re-zero pad columns (they are conv2's zero padding)
    h = conv(x, w1_ref, b1_ref)
    h = jnp.where(h >= 0, h, negative_slope * h)
    h = jnp.where(valid, h, 0.0)

    # conv2 + residual add
    y = conv(h.astype(ext_ref.dtype), w2_ref, b2_ref)
    out = x.astype(jnp.float32) + y
    o_ref[...] = jnp.where(valid, out, 0.0).astype(o_ref.dtype)


def _batch_tile(B, seg, C, K, itemsize, budget_bytes=16 << 20):
    """Largest divisor of B whose resident slab footprint fits the VMEM budget."""
    # Per batch element: x block + out block (both double-buffered) + halo
    # scratch + K-tap im2col scratch.
    per_batch = (2 + 2 + 1 + K) * C * seg * itemsize
    bt = max(1, min(B, budget_bytes // max(per_batch, 1)))
    while B % bt:                       # keep the grid exact
        bt -= 1
    # TODO(synk): for very long L (or if bt < B with bt*seg not a multiple of
    # 128), add an L-tile grid axis with halo handling instead of relying on
    # batch tiling alone.
    return bt


def residual_block(x, w1, b1, w2, b2, *, negative_slope):
    """x: (B, C, L); w*: (K, C_out, C_in); b*: (C_out, 1).  Odd K (PyTorch 'same')."""
    B, C, L = x.shape
    K = w1.shape[0]
    pad = K // 2
    seg = L + 2 * pad

    # ---- lane-dense packing (layout plumbing stays in XLA, outside the kernel)
    # Zero-pad every sequence, then lay the whole batch out along the lane dim:
    # (B, C, L) -> (C, B*seg), each length-`seg` segment is one padded sequence.
    xp = jnp.pad(x, ((0, 0), (0, 0), (pad, pad)))              # (B, C, seg)
    xcat = jnp.transpose(xp, (1, 0, 2)).reshape(C, B * seg)

    # Fold the K taps into the matmul contraction dim: (K, Co, Ci) -> (Co, K*Ci)
    w1f = jnp.transpose(w1, (1, 0, 2)).reshape(C, K * C)
    w2f = jnp.transpose(w2, (1, 0, 2)).reshape(C, K * C)

    bt = _batch_tile(B, seg, C, K, x.dtype.itemsize)
    cols = bt * seg
    grid = (B // bt,)

    kernel = functools.partial(_residual_block_kernel,
                               seq_len=L, seg=seg, kernel_size=K,
                               negative_slope=negative_slope)

    out_flat = pl.pallas_call(
        kernel,
        out_shape=jax.ShapeDtypeStruct((C, B * seg), x.dtype),
        grid=grid,
        in_specs=[
            pl.BlockSpec((C, cols), lambda s: (0, s)),       # packed activations
            pl.BlockSpec((C, K * C), lambda s: (0, 0)),      # conv1 weight (flat)
            pl.BlockSpec((C, 1), lambda s: (0, 0)),          # conv1 bias
            pl.BlockSpec((C, K * C), lambda s: (0, 0)),      # conv2 weight (flat)
            pl.BlockSpec((C, 1), lambda s: (0, 0)),          # conv2 bias
        ],
        out_specs=pl.BlockSpec((C, cols), lambda s: (0, s)),
        scratch_shapes=[
            pltpu.VMEM((C, cols + 2 * pad), x.dtype),        # halo-extended slab
            pltpu.VMEM((K * C, cols), x.dtype),              # im2col buffer
        ],
        compiler_params=pltpu.CompilerParams(
            dimension_semantics=("parallel",),
            vmem_limit_bytes=32 << 20,
        ),
    )(xcat, w1f, b1, w2f, b2)

    # ---- unpack: (C, B*seg) -> (B, C, L)
    out = out_flat.reshape(C, B, seg)[:, :, pad:pad + L]
    return jnp.transpose(out, (1, 0, 2))


def reference_forward(x, w1, b1, w2, b2, *, negative_slope):
    """Pure-JAX reference matching PyTorch Conv1d semantics (odd K)."""
    def conv1d(inp, w, b):
        K = w.shape[0]
        pad = K // 2
        L = inp.shape[2]
        xp = jnp.pad(inp, ((0, 0), (0, 0), (pad, pad)))
        out = jnp.broadcast_to(b[None, :, :], inp.shape).astype(jnp.float32)
        for k in range(K):
            out = out + jnp.einsum('oc,bcl->bol', w[k], xp[:, :, k:k + L])
        return out

    h = conv1d(x, w1, b1)
    h = jnp.where(h >= 0, h, negative_slope * h)
    return x + conv1d(h, w2, b2)


if __name__ == "__main__":
    # Module hyperparameters (nn.Conv1d(channel, channel, kernel_size,
    # padding=kernel_size // 2) x2 with LeakyReLU(negative_slope) in between).
    B, C, L = 2, 4, 16
    K = 3
    negative_slope = 0.1

    key = jax.random.PRNGKey(0)
    kx, k1, k2, k3, k4 = jax.random.split(key, 5)

    x = jax.random.normal(kx, (B, C, L), dtype=jnp.float32)
    # Deterministic synthetic parameters (shapes from nn.Conv1d(C, C, K)),
    # stored as (K, C_out, C_in) for tap-major handling in the wrapper.
    w1 = 0.2 * jax.random.normal(k1, (K, C, C), dtype=jnp.float32)
    b1 = 0.1 * jax.random.normal(k2, (C, 1), dtype=jnp.float32)
    w2 = 0.2 * jax.random.normal(k3, (K, C, C), dtype=jnp.float32)
    b2 = 0.1 * jax.random.normal(k4, (C, 1), dtype=jnp.float32)

    out = residual_block(x, w1, b1, w2, b2, negative_slope=negative_slope)
    out = jax.block_until_ready(out)

    ref = reference_forward(x, w1, b1, w2, b2, negative_slope=negative_slope)
    assert out.shape == (B, C, L)
    assert jnp.allclose(out, ref, atol=1e-4, rtol=1e-4), "mismatch vs reference"

    print("KERNEL_OK")
</pallas_src>

<mosaic_0001>
module attributes {stable_mosaic.version = 11 : i64} {
  func.func @_residual_block_kernel(%arg0: i32, %arg1: memref<4x36xf32, #tpu.memory_space<vmem>>, %arg2: memref<4x12xf32, #tpu.memory_space<vmem>>, %arg3: memref<4x1xf32, #tpu.memory_space<vmem>>, %arg4: memref<4x12xf32, #tpu.memory_space<vmem>>, %arg5: memref<4x1xf32, #tpu.memory_space<vmem>>, %arg6: memref<4x36xf32, #tpu.memory_space<vmem>>, %arg7: memref<4x38xf32, #tpu.memory_space<vmem>>, %arg8: memref<12x36xf32, #tpu.memory_space<vmem>>) attributes {dimension_semantics = [#tpu.dimension_semantics<parallel>], iteration_bounds = array<i64: 1>, scalar_prefetch = 0 : i64, scratch_operands = 2 : i64, tpu.core_type = #tpu.core_type<tc>, window_params = [{transform_indices = @transform_0, window_bounds = array<i64: 4, 36>}, {pipeline_mode = #tpu.pipeline_mode<synchronous>, transform_indices = @transform_1, window_bounds = array<i64: 4, 12>}, {pipeline_mode = #tpu.pipeline_mode<synchronous>, transform_indices = @transform_2, window_bounds = array<i64: 4, 1>}, {pipeline_mode = #tpu.pipeline_mode<synchronous>, transform_indices = @transform_3, window_bounds = array<i64: 4, 12>}, {pipeline_mode = #tpu.pipeline_mode<synchronous>, transform_indices = @transform_4, window_bounds = array<i64: 4, 1>}, {transform_indices = @transform_5, window_bounds = array<i64: 4, 36>}]} {
    %c0_i32 = arith.constant 0 : i32
    %0 = arith.cmpi eq, %arg0, %c0_i32 : i32
    %1 = arith.extui %0 : i1 to i32
    %c0_i32_0 = arith.constant 0 : i32
    %2 = arith.cmpi ne, %1, %c0_i32_0 : i32
    scf.if %2 {
      %cst_50 = arith.constant 0.000000e+00 : f32
      %67 = vector.broadcast %cst_50 : f32 to vector<4x38xf32>
      %c0_51 = arith.constant 0 : index
      %c0_52 = arith.constant 0 : index
      %68 = vector.load %arg7[%c0_51, %c0_52] : memref<4x38xf32, #tpu.memory_space<vmem>>, vector<4x38xf32>
      tpu.vector_store %arg7[%c0_51, %c0_52], %67 {strides = array<i32>} : memref<4x38xf32, #tpu.memory_space<vmem>>, vector<4x38xf32>,
    } else {
    }
    %3 = tpu.iota {dimensions = array<i32: 1>} : vector<1x36xi32>
    %c18_i32 = arith.constant 18 : i32
    %c0_i32_1 = arith.constant 0 : i32
    %4 = arith.cmpi eq, %c18_i32, %c0_i32_1 : i32
    %c1_i32 = arith.constant 1 : i32
    %5 = arith.select %4, %c1_i32, %c18_i32 : i32
    %6 = vector.broadcast %5 : i32 to vector<1x36xi32>
    %7 = arith.remsi %3, %6 : vector<1x36xi32>
    %c0_i32_2 = arith.constant 0 : i32
    %8 = vector.broadcast %c0_i32_2 : i32 to vector<1x36xi32>
    %9 = arith.cmpi ne, %7, %8 : vector<1x36xi32>
    %c0_i32_3 = arith.constant 0 : i32
    %10 = vector.broadcast %c0_i32_3 : i32 to vector<1x36xi32>
    %11 = arith.cmpi slt, %7, %10 : vector<1x36xi32>
    %c0_i32_4 = arith.constant 0 : i32
    %12 = arith.cmpi slt, %5, %c0_i32_4 : i32
    %13 = vector.broadcast %12 : i1 to vector<1x36xi1>
    %14 = vector.broadcast %13 : vector<1x36xi1> to vector<1x36xi1>
    %15 = arith.xori %11, %14 : vector<1x36xi1>
    %16 = arith.andi %15, %9 : vector<1x36xi1>
    %17 = vector.broadcast %5 : i32 to vector<1x36xi32>
    %18 = arith.addi %7, %17 : vector<1x36xi32>
    %19 = arith.select %16, %18, %7 : vector<1x36xi1>, vector<1x36xi32>
    %c1_i32_5 = arith.constant 1 : i32
    %20 = vector.broadcast %c1_i32_5 : i32 to vector<1x36xi32>
    %21 = arith.cmpi sge, %19, %20 : vector<1x36xi32>
    %c17_i32 = arith.constant 17 : i32
    %22 = vector.broadcast %c17_i32 : i32 to vector<1x36xi32>
    %23 = arith.cmpi slt, %19, %22 : vector<1x36xi32>
    %24 = arith.andi %21, %23 : vector<1x36xi1>
    %c0 = arith.constant 0 : index
    %c0_6 = arith.constant 0 : index
    %25 = vector.load %arg1[%c0, %c0_6] : memref<4x36xf32, #tpu.memory_space<vmem>>, vector<4x36xf32>
    %c0_7 = arith.constant 0 : index
    %c1 = arith.constant 1 : index
    %26 = vector.load %arg7[%c0_7, %c1] : memref<4x38xf32, #tpu.memory_space<vmem>>, vector<4x36xf32>
    tpu.vector_store %arg7[%c0_7, %c1], %25 {strides = array<i32>} : memref<4x38xf32, #tpu.memory_space<vmem>>, vector<4x36xf32>,
    %c0_8 = arith.constant 0 : index
    %c0_9 = arith.constant 0 : index
    %27 = vector.load %arg7[%c0_8, %c0_9] : memref<4x38xf32, #tpu.memory_space<vmem>>, vector<4x36xf32>
    %c0_10 = arith.constant 0 : index
    %c0_11 = arith.constant 0 : index
    %28 = vector.load %arg8[%c0_10, %c0_11] : memref<12x36xf32, #tpu.memory_space<vmem>>, vector<4x36xf32>
    tpu.vector_store %arg8[%c0_10, %c0_11], %27 {strides = array<i32>} : memref<12x36xf32, #tpu.memory_space<vmem>>, vector<4x36xf32>,
    %c0_12 = arith.constant 0 : index
    %c1_13 = arith.constant 1 : index
    %29 = vector.load %arg7[%c0_12, %c1_13] : memref<4x38xf32, #tpu.memory_space<vmem>>, vector<4x36xf32>
    %c4 = arith.constant 4 : index
    %c0_14 = arith.constant 0 : index
    %30 = vector.load %arg8[%c4, %c0_14] : memref<12x36xf32, #tpu.memory_space<vmem>>, vector<4x36xf32>
    tpu.vector_store %arg8[%c4, %c0_14], %29 {strides = array<i32>} : memref<12x36xf32, #tpu.memory_space<vmem>>, vector<4x36xf32>,
    %c0_15 = arith.constant 0 : index
    %c2 = arith.constant 2 : index
    %31 = vector.load %arg7[%c0_15, %c2] : memref<4x38xf32, #tpu.memory_space<vmem>>, vector<4x36xf32>
    %c8 = arith.constant 8 : index
    %c0_16 = arith.constant 0 : index
    %32 = vector.load %arg8[%c8, %c0_16] : memref<12x36xf32, #tpu.memory_space<vmem>>, vector<4x36xf32>
    tpu.vector_store %arg8[%c8, %c0_16], %31 {strides = array<i32>} : memref<12x36xf32, #tpu.memory_space<vmem>>, vector<4x36xf32>,
    %c0_17 = arith.constant 0 : index
    %c0_18 = arith.constant 0 : index
    %33 = vector.load %arg2[%c0_17, %c0_18] : memref<4x12xf32, #tpu.memory_space<vmem>>, vector<4x12xf32>
    %c0_19 = arith.constant 0 : index
    %c0_20 = arith.constant 0 : index
    %34 = vector.load %arg8[%c0_19, %c0_20] : memref<12x36xf32, #tpu.memory_space<vmem>>, vector<12x36xf32>
    %cst = arith.constant dense<0.000000e+00> : vector<4x36xf32>
    %35 = tpu.matmul %33, %34, %cst {dimension_numbers = #tpu.dot_dimension_numbers<[1], [0], [0], [1], [0, 0, 1, 1], [], []>} : vector<4x12xf32>, vector<12x36xf32>, vector<4x36xf32> -> vector<4x36xf32>
    %c0_21 = arith.constant 0 : index
    %c0_22 = arith.constant 0 : index
    %36 = vector.load %arg3[%c0_21, %c0_22] : memref<4x1xf32, #tpu.memory_space<vmem>>, vector<4x1xf32>
    %37 = vector.broadcast %36 : vector<4x1xf32> to vector<4x36xf32>
    %38 = arith.addf %35, %37 : vector<4x36xf32>
    %cst_23 = arith.constant 0.000000e+00 : f32
    %39 = vector.broadcast %cst_23 : f32 to vector<4x36xf32>
    %40 = arith.cmpf oge, %38, %39 : vector<4x36xf32>
    %cst_24 = arith.constant 1.000000e-01 : f32
    %41 = vector.broadcast %cst_24 : f32 to vector<4x36xf32>
    %42 = arith.mulf %41, %38 : vector<4x36xf32>
    %43 = arith.select %40, %38, %42 : vector<4x36xi1>, vector<4x36xf32>
    %cst_25 = arith.constant 0.000000e+00 : f32
    %44 = vector.shape_cast %24 : vector<1x36xi1> to vector<1x36xi1>
    %45 = vector.broadcast %44 : vector<1x36xi1> to vector<4x36xi1>
    %46 = vector.broadcast %cst_25 : f32 to vector<4x36xf32>
    %47 = arith.select %45, %43, %46 : vector<4x36xi1>, vector<4x36xf32>
    %c0_26 = arith.constant 0 : index
    %c1_27 = arith.constant 1 : index
    %48 = vector.load %arg7[%c0_26, %c1_27] : memref<4x38xf32, #tpu.memory_space<vmem>>, vector<4x36xf32>
    tpu.vector_store %arg7[%c0_26, %c1_27], %47 {strides = array<i32>} : memref<4x38xf32, #tpu.memory_space<vmem>>, vector<4x36xf32>,
    %c0_28 = arith.constant 0 : index
    %c0_29 = arith.constant 0 : index
    %49 = vector.load %arg7[%c0_28, %c0_29] : memref<4x38xf32, #tpu.memory_space<vmem>>, vector<4x36xf32>
    %c0_30 = arith.constant 0 : index
    %c0_31 = arith.constant 0 : index
    %50 = vector.load %arg8[%c0_30, %c0_31] : memref<12x36xf32, #tpu.memory_space<vmem>>, vector<4x36xf32>
    tpu.vector_store %arg8[%c0_30, %c0_31], %49 {strides = array<i32>} : memref<12x36xf32, #tpu.memory_space<vmem>>, vector<4x36xf32>,
    %c0_32 = arith.constant 0 : index
    %c1_33 = arith.constant 1 : index
    %51 = vector.load %arg7[%c0_32, %c1_33] : memref<4x38xf32, #tpu.memory_space<vmem>>, vector<4x36xf32>
    %c4_34 = arith.constant 4 : index
    %c0_35 = arith.constant 0 : index
    %52 = vector.load %arg8[%c4_34, %c0_35] : memref<12x36xf32, #tpu.memory_space<vmem>>, vector<4x36xf32>
    tpu.vector_store %arg8[%c4_34, %c0_35], %51 {strides = array<i32>} : memref<12x36xf32, #tpu.memory_space<vmem>>, vector<4x36xf32>,
    %c0_36 = arith.constant 0 : index
    %c2_37 = arith.constant 2 : index
    %53 = vector.load %arg7[%c0_36, %c2_37] : memref<4x38xf32, #tpu.memory_space<vmem>>, vector<4x36xf32>
    %c8_38 = arith.constant 8 : index
    %c0_39 = arith.constant 0 : index
    %54 = vector.load %arg8[%c8_38, %c0_39] : memref<12x36xf32, #tpu.memory_space<vmem>>, vector<4x36xf32>
    tpu.vector_store %arg8[%c8_38, %c0_39], %53 {strides = array<i32>} : memref<12x36xf32, #tpu.memory_space<vmem>>, vector<4x36xf32>,
    %c0_40 = arith.constant 0 : index
    %c0_41 = arith.constant 0 : index
    %55 = vector.load %arg4[%c0_40, %c0_41] : memref<4x12xf32, #tpu.memory_space<vmem>>, vector<4x12xf32>
    %c0_42 = arith.constant 0 : index
    %c0_43 = arith.constant 0 : index
    %56 = vector.load %arg8[%c0_42, %c0_43] : memref<12x36xf32, #tpu.memory_space<vmem>>, vector<12x36xf32>
    %cst_44 = arith.constant dense<0.000000e+00> : vector<4x36xf32>
    %57 = tpu.matmul %55, %56, %cst_44 {dimension_numbers = #tpu.dot_dimension_numbers<[1], [0], [0], [1], [0, 0, 1, 1], [], []>} : vector<4x12xf32>, vector<12x36xf32>, vector<4x36xf32> -> vector<4x36xf32>
    %c0_45 = arith.constant 0 : index
    %c0_46 = arith.constant 0 : index
    %58 = vector.load %arg5[%c0_45, %c0_46] : memref<4x1xf32, #tpu.memory_space<vmem>>, vector<4x1xf32>
    %59 = vector.broadcast %58 : vector<4x1xf32> to vector<4x36xf32>
    %60 = arith.addf %57, %59 : vector<4x36xf32>
    %61 = arith.addf %25, %60 : vector<4x36xf32>
    %cst_47 = arith.constant 0.000000e+00 : f32
    %62 = vector.shape_cast %24 : vector<1x36xi1> to vector<1x36xi1>
    %63 = vector.broadcast %62 : vector<1x36xi1> to vector<4x36xi1>
    %64 = vector.broadcast %cst_47 : f32 to vector<4x36xf32>
    %65 = arith.select %63, %61, %64 : vector<4x36xi1>, vector<4x36xf32>
    %c0_48 = arith.constant 0 : index
    %c0_49 = arith.constant 0 : index
    %66 = vector.load %arg6[%c0_48, %c0_49] : memref<4x36xf32, #tpu.memory_space<vmem>>, vector<4x36xf32>
    tpu.vector_store %arg6[%c0_48, %c0_49], %65 {strides = array<i32>} : memref<4x36xf32, #tpu.memory_space<vmem>>, vector<4x36xf32>,
    return
  }
  func.func @transform_0(%arg0: i32) -> (i32, i32) {
    %c0_i32 = arith.constant 0 : i32
    %c0_i32_0 = arith.constant 0 : i32
    return %c0_i32, %arg0 : i32, i32
  }
  func.func @transform_1(%arg0: i32) -> (i32, i32) {
    %c0_i32 = arith.constant 0 : i32
    %c0_i32_0 = arith.constant 0 : i32
    %c0_i32_1 = arith.constant 0 : i32
    return %c0_i32, %c0_i32_0 : i32, i32
  }
  func.func @transform_2(%arg0: i32) -> (i32, i32) {
    %c0_i32 = arith.constant 0 : i32
    %c0_i32_0 = arith.constant 0 : i32
    %c0_i32_1 = arith.constant 0 : i32
    return %c0_i32, %c0_i32_0 : i32, i32
  }
  func.func @transform_3(%arg0: i32) -> (i32, i32) {
    %c0_i32 = arith.constant 0 : i32
    %c0_i32_0 = arith.constant 0 : i32
    %c0_i32_1 = arith.constant 0 : i32
    return %c0_i32, %c0_i32_0 : i32, i32
  }
  func.func @transform_4(%arg0: i32) -> (i32, i32) {
    %c0_i32 = arith.constant 0 : i32
    %c0_i32_0 = arith.constant 0 : i32
    %c0_i32_1 = arith.constant 0 : i32
    return %c0_i32, %c0_i32_0 : i32, i32
  }
  func.func @transform_5(%arg0: i32) -> (i32, i32) {
    %c0_i32 = arith.constant 0 : i32
    %c0_i32_0 = arith.constant 0 : i32
    return %c0_i32, %arg0 : i32, i32
  }
}

</mosaic_0001>

<llo_original>
// kernel: tpu_custom_call.1
$region0: #{tpu_custom_call.1}
  #allocation0 [shape = 'u32[]', space=smem, size = 0x4, offset = 0x4, fixed_abs, tag = 'smem constant byte address 0x4 - core index']
  #allocation1 [shape = 'u32[72,128]{1,0:T(1,128)}', space=vmem, size = 0x9000, scoped, tag = 'internal scratch']
  #allocation2 [shape = 'f32[4,38]{1,0:T(4,128)}', space=vmem, size = 0x800, scoped, tag = 'scratch operand']
  #allocation3 [shape = 'f32[12,36]{1,0:T(8,128)}', space=vmem, size = 0x2000, scoped, tag = 'scratch operand']
  %s0 = inlined_call_operand.vmem [shape: f32[4,36], index: 0, kind: input, shape index: {}]
  %s1 = inlined_call_operand.vmem [shape: f32[4,12], index: 1, kind: input, shape index: {}]
  %s2 = inlined_call_operand.vmem [shape: f32[4,1], index: 2, kind: input, shape index: {}]
  %s3 = inlined_call_operand.hbm [shape: f32[4,12], index: 3, kind: input, shape index: {}]
  %s4 = inlined_call_operand.vmem [shape: f32[4,1], index: 4, kind: input, shape index: {}]
  %s5 = inlined_call_operand.hbm [shape: f32[4,36], index: 5, kind: output, shape index: {}]
  %s6 = sld [smem:[#allocation0]]
  $region38: #{tpu_custom_call.1} parent=0
    _
  %s8 = ssub.s32 1, %s6
  %s9 = scalar_select 0, %s8, %s6
  $region1: #{tpu_custom_call.1} parent=0
    #allocation4 [shape = 'u8[2048]{0}', space=vmem, size = 0x800, scoped, tag = 'input window, operand 3, single buffered']
    #allocation5 [shape = 's32[1]{0}', space=sflag, size = 0x4, scoped, tag = 'scoped memory for tpu_custom_call.1']
    #allocation6 [shape = 's32[1]{0}', space=sflag, size = 0x4, scoped, tag = 'scoped memory for tpu_custom_call.1']
    #allocation7 [shape = 'u8[2048]{0}', space=vmem, size = 0x800, scoped, tag = 'output window, operand 0, single buffered']
    %10 = vsyncpa [#allocation5], 0
    %11 = vsyncpa [#allocation6], 0
    // Predicated region
    $region2: #{tpu_custom_call.1} parent=1 // pred_check
      _
    $region3: #{tpu_custom_call.1} parent=1 // pred_check_branch
      %13 = sbr.rel (0) target = $region5
    $region4: #{tpu_custom_call.1} parent=1 // pred_region
      _
    $region5: #{tpu_custom_call.1} parent=1 // pred_fallthru
      _
    // Predicated region
    $region6: #{tpu_custom_call.1} parent=1 // pred_check
      _
    $region7: #{tpu_custom_call.1} parent=1 // pred_check_branch
      %15 = sbr.rel (0) target = $region9
    $region8: #{tpu_custom_call.1} parent=1 // pred_region
      _
    $region9: #{tpu_custom_call.1} parent=1 // pred_fallthru
      _
    // Predicated region
    $region10: #{tpu_custom_call.1} parent=1 // pred_check
      _
    $region11: #{tpu_custom_call.1} parent=1 // pred_check_branch
      %17 = sbr.rel (0) target = $region13
    $region12: #{tpu_custom_call.1} parent=1 // pred_region
      _
    $region13: #{tpu_custom_call.1} parent=1 // pred_fallthru
      _
    // Predicated region
    $region14: #{tpu_custom_call.1} parent=1 // pred_check
      _
    $region15: #{tpu_custom_call.1} parent=1 // pred_check_branch
      %19 = sbr.rel (0) target = $region17
    $region16: #{tpu_custom_call.1} parent=1 // pred_region
      %21 = vsyncadd [#allocation5], 0
      %s23 = sshll.u32 %s3, 4
      %s24 = int_to_ptr.hbm [resolvable:$true] %s23
      %s25 = sshll.u32 [#allocation4], 4
      %s26 = int_to_ptr.vmem [resolvable:$true] %s25
      %28 = dma.hbm_to_vmem [thread:$0]  %s24, 64, %s26, [#allocation5]
    $region17: #{tpu_custom_call.1} parent=1 // pred_fallthru
      _
    // Predicated region
    $region18: #{tpu_custom_call.1} parent=1 // pred_check
      _
    $region19: #{tpu_custom_call.1} parent=1 // pred_check_branch
      %30 = sbr.rel (0) target = $region21
    $region20: #{tpu_custom_call.1} parent=1 // pred_region
      _
    $region21: #{tpu_custom_call.1} parent=1 // pred_fallthru
      _
    // Predicated region
    $region22: #{tpu_custom_call.1} parent=1 // pred_check
      _
    $region23: #{tpu_custom_call.1} parent=1 // pred_check_branch
      %32 = sbr.rel (0) target = $region25
    $region24: #{tpu_custom_call.1} parent=1 // pred_region
      %34 = dma.done [#allocation5], 64
    $region25: #{tpu_custom_call.1} parent=1 // pred_fallthru
      _
    %p35 = scmp.eq.s32.totalorder 0, 0
    // Predicated region
    $region26: #{tpu_custom_call.1} parent=1 // pred_check
      %p36 = pneg %p35
    $region27: #{tpu_custom_call.1} parent=1 // pred_check_branch
      %38 = sbr.rel (%p36) target = $region29
    $region28: #{tpu_custom_call.1} parent=1 // pred_region
      %vm39 = vcmask 306176
      %40 = vst.msk [vmem:[#allocation2] sm:$0xf] %vm39, 0.0
    $region29: #{tpu_custom_call.1} parent=1 // pred_fallthru
      _
    %v41 = vlaneseq
    %v42 = vand.u32 %v41, 127
    %vm43 = vcmp.lt.s32.totalorder %v42, 0
    %v44 = vsub.s32 0, %v42
    %v45 = vsel %vm43, %v44, %v42
    %v46 = vand.u32 %v45, 65535
    %v47 = vshrl.u32 %v45, 16
    %v49 = vmul.u32 %v46, 14564
    %v50 = vmul.u32 %v46, 58254
    %v51 = vmul.u32 %v47, 14564
    %v52 = vmul.u32 %v47, 58254
    %v53 = vshll.u32 %v50, 16
    %v54 = vshrl.u32 %v50, 16
    %v55 = vshll.u32 %v51, 16
    %v56 = vshrl.u32 %v51, 16
    %vm57 = vc.u32 %v49, %v53
    %v58 = vsel %vm57, 1, 0
    %v59 = vadd.s32 %v49, %v53
    %v60 = vadd.s32 %v52, %v58
    %vm61 = vc.u32 %v59, %v55
    %v62 = vsel %vm61, 1, 0
    %v63 = vadd.s32 %v59, %v55
    %v64 = vadd.s32 %v60, %v62
    %v65 = vadd.s32 %v64, %v54
    %v66 = vadd.s32 %v65, %v56
    %v67 = vshrl.u32 %v66, 4
    %v68 = vmul.u32 %v67, 18
    %v69 = vsub.s32 %v45, %v68
    %v70 = vsub.s32 0, %v69
    %v71 = vsel %vm43, %v70, %v69
    %vm72 = vcmp.ne.s32.totalorder %v71, 0
    %vm73 = vcmp.lt.s32.totalorder %v71, 0
    %vm74 = vmand %vm73, %vm72
    %v75 = vadd.s32 %v71, 18
    %v76 = vsel %vm74, %v75, %v71
    %vm77 = vcmp.ge.s32.totalorder %v76, 1
    %vm78 = vcmp.lt.s32.totalorder %v76, 17
    %vm79 = vmand %vm77, %vm78
    %v80 = vld [vmem:[%s0] sm:$0xf]
    %82 = vrot.lane.b32.xlu0 %v80, 1
    %v83 = vpop.permute.xlu0 %82
    %vm85 = vcmask 297992
    %86 = vst.msk [vmem:[#allocation2] sm:$0xf] %vm85, %v83
    %v87 = vld [vmem:[#allocation2] sm:$0xf]
    %vm88 = vcmask 289792
    %89 = vst.msk [vmem:[#allocation3] sm:$0xf] %vm88, %v87
    %v90 = vld [vmem:[#allocation2] sm:$0xf]
    %92 = vrot.lane.b32.xlu0 %v90, 127
    %v93 = vpop.permute.xlu0 %92
    %95 = vst.msk [vmem:[#allocation3 + $0x4] sm:$0xf] %vm88, %v93
    %v96 = vld [vmem:[#allocation2] sm:$0xf]
    %98 = vrot.lane.b32.xlu0 %v96, 126
    %v99 = vpop.permute.xlu0 %98
    %101 = vst.msk [vmem:[#allocation3 + $0x8] sm:$0xf] %vm88, %v99
    %v102 = vld [vmem:[%s1] sm:$0xf]
    %v103 = vld [vmem:[#allocation3] sm:$0xff]
    %v104 = vld [vmem:[#allocation3 + $0x8] sm:$0xf]
    %v105 = vld [vmem:[%s2] sm:$0xf]
    %107 = vset.pattern.permute.xlu0 0
    %108 = vperm.xlu0 %107, %v105
    %v109 = vpop.permute.xlu0 %108
    %vm111 = vcmask 97280
    %v113 = vsel %vm111, %v102, 0
    %vm115 = vcmask 1043456
    %v117 = vsel %vm115, %v104, 0
    %119 = vmatpush.msra.mxu0 0.0
    %120 = vmatpush.msra.mxu0 0.0
    %121 = vmatpush.msra.mxu0 0.0
    %122 = vmatpush.msra.mxu0 0.0
    %123 = vmatpush.msra.mxu0 0.0
    %124 = vmatpush.msra.mxu0 0.0
    %125 = vmatpush.msra.mxu0 0.0
    %126 = vmatpush.msra.mxu0 0.0
    %127 = vmatpush.msra.mxu0 0.0
    %128 = vmatpush.msra.mxu0 0.0
    %129 = vmatpush.msra.mxu0 0.0
    %130 = vmatpush.msra.mxu0 0.0
    %131 = vmatpush.msra.mxu0 0.0
    %132 = vmatpush.msra.mxu0 0.0
    %133 = vmatpush.msra.mxu0 %v117
    %134 = vmatpush.msra.mxu0 %v103
    %135 = vmatmul.f32.gmra.mxu0 %v113
    %v136 = vpop.f32.mrf.mxu0
    %v137 = vadd.f32 %v109, %v136
    %138 = vdwg.mxu0
    %vm139 = vcmp.ge.f32.partialorder %v137, 0.0
    %v140 = vmul.f32 %v137, 0.1
    %v141 = vsel %vm139, %v137, %v140
    %v142 = vsel %vm79, 1, 0
    %vm143 = vcmp.eq.s32.totalorder %v142, 1
    %v144 = vsel %vm143, %v141, 0.0
    %146 = vrot.lane.b32.xlu0 %v144, 1
    %v147 = vpop.permute.xlu0 %146
    %149 = vst.msk [vmem:[#allocation2] sm:$0xf] %vm85, %v147
    %v150 = vld [vmem:[#allocation2] sm:$0xf]
    %151 = vst.msk [vmem:[#allocation3] sm:$0xf] %vm88, %v150
    %v152 = vld [vmem:[#allocation2] sm:$0xf]
    %154 = vrot.lane.b32.xlu0 %v152, 127
    %v155 = vpop.permute.xlu0 %154
    %157 = vst.msk [vmem:[#allocation3 + $0x4] sm:$0xf] %vm88, %v155
    %v158 = vld [vmem:[#allocation2] sm:$0xf]
    %160 = vrot.lane.b32.xlu0 %v158, 126
    %v161 = vpop.permute.xlu0 %160
    %163 = vst.msk [vmem:[#allocation3 + $0x8] sm:$0xf] %vm88, %v161
    %v164 = vld [vmem:[#allocation4] sm:$0xf]
    %v165 = vld [vmem:[#allocation3] sm:$0xff]
    %v166 = vld [vmem:[#allocation3 + $0x8] sm:$0xf]
    %v167 = vld [vmem:[%s4] sm:$0xf]
    %169 = vset.pattern.permute.xlu0 0
    %170 = vperm.xlu0 %169, %v167
    %v171 = vpop.permute.xlu0 %170
    %v174 = vsel %vm111, %v164, 0
    %v177 = vsel %vm115, %v166, 0
    %179 = vmatpush.msra.mxu0 0.0
    %180 = vmatpush.msra.mxu0 0.0
    %181 = vmatpush.msra.mxu0 0.0
    %182 = vmatpush.msra.mxu0 0.0
    %183 = vmatpush.msra.mxu0 0.0
    %184 = vmatpush.msra.mxu0 0.0
    %185 = vmatpush.msra.mxu0 0.0
    %186 = vmatpush.msra.mxu0 0.0
    %187 = vmatpush.msra.mxu0 0.0
    %188 = vmatpush.msra.mxu0 0.0
    %189 = vmatpush.msra.mxu0 0.0
    %190 = vmatpush.msra.mxu0 0.0
    %191 = vmatpush.msra.mxu0 0.0
    %192 = vmatpush.msra.mxu0 0.0
    %193 = vmatpush.msra.mxu0 %v177
    %194 = vmatpush.msra.mxu0 %v165
    %195 = vmatmul.f32.gmra.mxu0 %v174
    %v196 = vpop.f32.mrf.mxu0
    %v197 = vadd.f32 %v171, %v196
    %198 = vdwg.mxu0
    %v199 = vadd.f32 %v80, %v197
    %v200 = vsel %vm143, %v199, 0.0
    %201 = vst.msk [vmem:[#allocation7] sm:$0xf] %vm88, %v200
    // Predicated region
    $region30: #{tpu_custom_call.1} parent=1 // pred_check
      _
    $region31: #{tpu_custom_call.1} parent=1 // pred_check_branch
      %203 = sbr.rel (0) target = $region33
    $region32: #{tpu_custom_call.1} parent=1 // pred_region
      %205 = vsyncadd [#allocation6], 0
      %s207 = sshll.u32 [#allocation7], 4
      %s208 = int_to_ptr.vmem [resolvable:$true] %s207
      %s209 = sshll.u32 %s5, 4
      %s210 = int_to_ptr.hbm [resolvable:$true] %s209
      %212 = dma.vmem_to_hbm [thread:$0]  %s208, 64, %s210, [#allocation6]
    $region33: #{tpu_custom_call.1} parent=1 // pred_fallthru
      _
    // Predicated region
    $region34: #{tpu_custom_call.1} parent=1 // pred_check
      _
    $region35: #{tpu_custom_call.1} parent=1 // pred_check_branch
      %214 = sbr.rel (0) target = $region37
    $region36: #{tpu_custom_call.1} parent=1 // pred_region
      %216 = dma.done [#allocation6], 64
    $region37: #{tpu_custom_call.1} parent=1 // pred_fallthru
      _
    %217 = vsyncpa [#allocation5], 1
    %218 = vsyncpa [#allocation6], 1

</llo_original>
